<compile_context>
chip_gen: v6e
topology: v6e:2x2x1
jax: 0.10.0
libtpu: 0.0.40
codegen_flags: <defaults>
</compile_context>

<pallas_src>
import math
import functools

import jax
import jax.numpy as jnp
from jax.experimental import pallas as pl
from jax.experimental.pallas import tpu as pltpu


def _vmem_capacity_bytes():
    """Physical VMEM per core; conservative (v7x-sized) fallback if the query
    is unavailable."""
    try:
        return int(pltpu.get_tpu_info().vmem_capacity_bytes)
    except Exception:
        return 64 * 1024 * 1024


# ---------------------------------------------------------------------------
# Kernel 1: fused Q/K/V projection.
#   One (TM, H) x (H, 3H) bf16 MXU matmul per token tile, one wide lane-dense
#   (TM, 3H) bf16 store.  Weight/bias pinned via index_map (0, 0).
# ---------------------------------------------------------------------------
def _qkv_proj_kernel(x_ref, w_ref, b_ref, qkv_ref):
    x = x_ref[...].astype(jnp.bfloat16)                       # bf16 MXU operand
    y = jnp.dot(x, w_ref[...], preferred_element_type=jnp.float32) + b_ref[...]
    qkv_ref[...] = y.astype(qkv_ref.dtype)                    # single wide store


# ---------------------------------------------------------------------------
# Kernel 2: attention for one (batch, head-group) block.
#   q/k/v refs are lane-dense windows of the fused (B, S, 3H) array (bf16).
#   Per-head scores/softmax in f32; the group's context is assembled and
#   written with ONE full-width store.
# ---------------------------------------------------------------------------
def _attn_kernel(q_ref, k_ref, v_ref, mask_ref, o_ref, *, scale, hb, dh,
                 q_off, k_off, v_off):
    mask = mask_ref[0]                         # (1, S) additive f32, hoisted
    parts = []
    for h in range(hb):                        # static unroll over heads
        lo = h * dh
        qh = q_ref[0, :, q_off + lo:q_off + lo + dh] * scale   # bf16 (S, dh)
        kh = k_ref[0, :, k_off + lo:k_off + lo + dh]           # bf16 (S, dh)
        vh = v_ref[0, :, v_off + lo:v_off + lo + dh]           # bf16 (S, dh)
        # QK^T without materializing K^T: contract dh on both operands.
        s = jax.lax.dot_general(qh, kh, (((1,), (1,)), ((), ())),
                                preferred_element_type=jnp.float32)  # (S, S)
        s = s + mask
        m = jnp.max(s, axis=-1, keepdims=True)
        e = jnp.exp(s - m)
        p = e / jnp.sum(e, axis=-1, keepdims=True)             # exact softmax
        parts.append(jnp.dot(p.astype(jnp.bfloat16), vh,
                             preferred_element_type=jnp.float32))  # (S, dh)
    # Single full-width lane-dense store for the whole head group.
    o_ref[0] = jnp.concatenate(parts, axis=-1).astype(o_ref.dtype)


# ---------------------------------------------------------------------------
# Kernel 3: output dense + bias + residual + LayerNorm (BertSelfOutput).
# ---------------------------------------------------------------------------
def _out_ln_kernel(ctx_ref, w_ref, b_ref, res_ref, gamma_ref, beta_ref, o_ref,
                   *, eps):
    y = jnp.dot(ctx_ref[...], w_ref[...],                      # bf16 x bf16
                preferred_element_type=jnp.float32) + b_ref[...]
    z = y + res_ref[...]                                       # f32 residual
    mu = jnp.mean(z, axis=-1, keepdims=True)
    var = jnp.mean((z - mu) ** 2, axis=-1, keepdims=True)
    zn = (z - mu) * jax.lax.rsqrt(var + eps)
    o_ref[...] = (zn * gamma_ref[...] + beta_ref[...]).astype(o_ref.dtype)


# ---------------------------------------------------------------------------
# Helpers
# ---------------------------------------------------------------------------
def _head_group(num_heads, dh):
    """Smallest head group whose lane width (hb*dh) is a multiple of 128.
    Returns (hb, True) if such a group exists (lane-dense fused-array blocks
    are legal), else (num_heads, False) -> fall back to full 3H-wide blocks
    with in-kernel Q/K/V offsets."""
    for hb in range(1, num_heads + 1):
        if num_heads % hb == 0 and (hb * dh) % 128 == 0:
            return hb, True
    return num_heads, False


# ---------------------------------------------------------------------------
# Wrapper
# ---------------------------------------------------------------------------
def bert_attention(hidden_states, attention_mask_add, params, num_heads,
                   eps=1e-12):
    """hidden_states: (B, S, H) f32; attention_mask_add: (B, S) additive f32."""
    B, S, H = hidden_states.shape
    dh = H // num_heads
    rows = B * S
    x2 = hidden_states.reshape(rows, H)

    # Per-generation tiling / VMEM budget (v7x has 64 MiB, v5e/v6e 128 MiB).
    vmem_cap = _vmem_capacity_bytes()
    vmem_limit = min(vmem_cap - vmem_cap // 4, 96 * 1024 * 1024)
    tm_cap = 512 if vmem_cap >= 96 * 1024 * 1024 else 256
    TM = rows if rows <= tm_cap else tm_cap
    grid_rows = pl.cdiv(rows, TM)

    cparams_1d = pltpu.CompilerParams(
        dimension_semantics=("parallel",), vmem_limit_bytes=vmem_limit)

    # Resident weights in bf16: 2x MXU throughput, half the VMEM footprint.
    w_qkv = jnp.concatenate([params["wq"], params["wk"], params["wv"]],
                            axis=1).astype(jnp.bfloat16)
    b_qkv = jnp.concatenate([params["bq"], params["bk"], params["bv"]], axis=1)
    wo = params["wo"].astype(jnp.bfloat16)

    # --- Kernel 1: fused QKV projection, single (rows, 3H) bf16 output ------
    qkv2 = pl.pallas_call(
        _qkv_proj_kernel,
        out_shape=jax.ShapeDtypeStruct((rows, 3 * H), jnp.bfloat16),
        grid_spec=pltpu.PrefetchScalarGridSpec(
            num_scalar_prefetch=0,
            grid=(grid_rows,),
            in_specs=[
                pl.BlockSpec((TM, H), lambda i: (i, 0)),       # tokens
                pl.BlockSpec((H, 3 * H), lambda i: (0, 0)),    # fused weight
                pl.BlockSpec((1, 3 * H), lambda i: (0, 0)),    # fused bias
            ],
            out_specs=pl.BlockSpec((TM, 3 * H), lambda i: (i, 0)),
        ),
        compiler_params=cparams_1d,
    )(x2, w_qkv, b_qkv)

    # Free reshapes only — no head transposes through HBM.
    qkv3 = qkv2.reshape(B, S, 3 * H)
    mask3 = attention_mask_add.reshape(B, 1, S).astype(jnp.float32)

    hb, fused_lane_blocks = _head_group(num_heads, dh)
    if fused_lane_blocks:
        # Lane-dense (hb*dh)-wide windows of the fused array: Q at block g,
        # K at block n_groups+g, V at block 2*n_groups+g.
        n_groups = num_heads // hb
        hbd = hb * dh
        q_spec = pl.BlockSpec((1, S, hbd), lambda b, g: (b, 0, g))
        k_spec = pl.BlockSpec((1, S, hbd), lambda b, g: (b, 0, n_groups + g))
        v_spec = pl.BlockSpec((1, S, hbd), lambda b, g: (b, 0, 2 * n_groups + g))
        o_spec = pl.BlockSpec((1, S, hbd), lambda b, g: (b, 0, g))
        offs = (0, 0, 0)
    else:
        # H not a multiple of 128: take the whole (1, S, 3H) block (equal to
        # the full lane extent, always legal) and offset Q/K/V in-kernel.
        n_groups = 1
        q_spec = k_spec = v_spec = pl.BlockSpec(
            (1, S, 3 * H), lambda b, g: (b, 0, 0))
        o_spec = pl.BlockSpec((1, S, H), lambda b, g: (b, 0, 0))
        offs = (0, H, 2 * H)

    ctx = pl.pallas_call(
        functools.partial(_attn_kernel, scale=1.0 / math.sqrt(dh), hb=hb,
                          dh=dh, q_off=offs[0], k_off=offs[1], v_off=offs[2]),
        out_shape=jax.ShapeDtypeStruct((B, S, H), jnp.bfloat16),
        grid_spec=pltpu.PrefetchScalarGridSpec(
            num_scalar_prefetch=0,
            grid=(B, n_groups),
            in_specs=[q_spec, k_spec, v_spec,
                      pl.BlockSpec((1, 1, S), lambda b, g: (b, 0, 0))],
            out_specs=o_spec,
        ),
        compiler_params=pltpu.CompilerParams(
            dimension_semantics=("parallel", "parallel"),
            vmem_limit_bytes=vmem_limit),
    )(qkv3, qkv3, qkv3, mask3)

    # Heads are already merged — ctx is (B, S, H) bf16; reshape is free.
    ctx2 = ctx.reshape(rows, H)

    # --- Kernel 3: output dense + residual + LayerNorm -----------------------
    out2 = pl.pallas_call(
        functools.partial(_out_ln_kernel, eps=eps),
        out_shape=jax.ShapeDtypeStruct((rows, H), jnp.float32),
        grid_spec=pltpu.PrefetchScalarGridSpec(
            num_scalar_prefetch=0,
            grid=(grid_rows,),
            in_specs=[
                pl.BlockSpec((TM, H), lambda i: (i, 0)),   # context (bf16)
                pl.BlockSpec((H, H), lambda i: (0, 0)),    # wo (bf16)
                pl.BlockSpec((1, H), lambda i: (0, 0)),    # bo
                pl.BlockSpec((TM, H), lambda i: (i, 0)),   # residual (f32)
                pl.BlockSpec((1, H), lambda i: (0, 0)),    # gamma
                pl.BlockSpec((1, H), lambda i: (0, 0)),    # beta
            ],
            out_specs=pl.BlockSpec((TM, H), lambda i: (i, 0)),
        ),
        compiler_params=cparams_1d,
    )(ctx2, wo, params["bo"], x2, params["gamma"], params["beta"])

    return out2.reshape(B, S, H)


# ---------------------------------------------------------------------------
# Pure-JAX reference (for correctness check)
# ---------------------------------------------------------------------------
def _reference(x, mask_add, p, nh, eps=1e-12):
    B, S, H = x.shape
    dh = H // nh
    x2 = x.reshape(B * S, H)

    def heads(t):
        return t.reshape(B, S, nh, dh).transpose(0, 2, 1, 3)

    q = heads(x2 @ p["wq"] + p["bq"])
    k = heads(x2 @ p["wk"] + p["bk"])
    v = heads(x2 @ p["wv"] + p["bv"])
    scores = jnp.einsum("bhqd,bhkd->bhqk", q, k) / math.sqrt(dh)
    scores = scores + mask_add[:, None, None, :]
    probs = jax.nn.softmax(scores, axis=-1)
    ctx = jnp.einsum("bhqk,bhkd->bhqd", probs, v)
    ctx2 = ctx.transpose(0, 2, 1, 3).reshape(B * S, H)
    y = ctx2 @ p["wo"] + p["bo"]
    z = y + x2
    mu = z.mean(-1, keepdims=True)
    var = ((z - mu) ** 2).mean(-1, keepdims=True)
    out = (z - mu) / jnp.sqrt(var + eps) * p["gamma"] + p["beta"]
    return out.reshape(B, S, H)


if __name__ == "__main__":
    # Small BERT-like config: dh = 64 (real BERT head size) so a 2-head group
    # gives the 128-lane-dense attention blocks exercised in production.
    B, S, H, NH = 2, 8, 256, 4

    key = jax.random.PRNGKey(0)
    ks = jax.random.split(key, 10)
    init = lambda k, shape: (0.02 * jax.random.normal(k, shape)).astype(jnp.float32)

    params = {
        "wq": init(ks[0], (H, H)), "bq": init(ks[1], (1, H)),
        "wk": init(ks[2], (H, H)), "bk": init(ks[3], (1, H)),
        "wv": init(ks[4], (H, H)), "bv": init(ks[5], (1, H)),
        "wo": init(ks[6], (H, H)), "bo": init(ks[7], (1, H)),
        "gamma": jnp.ones((1, H), jnp.float32),
        "beta": jnp.zeros((1, H), jnp.float32),
    }

    hidden = jax.random.normal(ks[8], (B, S, H), dtype=jnp.float32)

    # HF-style additive mask: 0 for attend, -10000 for masked (last 2 tokens of batch 1).
    keep = jnp.ones((B, S), jnp.float32).at[1, -2:].set(0.0)
    mask_add = (1.0 - keep) * -10000.0

    out = bert_attention(hidden, mask_add, params, NH)
    out = jax.block_until_ready(out)

    ref = _reference(hidden, mask_add, params, NH)
    assert out.shape == (B, S, H)
    # bf16 MXU operands + bf16 Q/K/V/ctx intermediates => ~0.4% relative error
    # on the matmul chain; residual/LayerNorm remain f32.
    assert jnp.allclose(out, ref, atol=1e-2, rtol=1e-2), "mismatch vs reference"

    print("KERNEL_OK")
</pallas_src>

<mosaic_0001>
module attributes {stable_mosaic.version = 11 : i64} {
  func.func @_qkv_proj_kernel(%arg0: i32, %arg1: memref<16x256xf32, #tpu.memory_space<vmem>>, %arg2: memref<256x768xbf16, #tpu.memory_space<vmem>>, %arg3: memref<1x768xf32, #tpu.memory_space<vmem>>, %arg4: memref<16x768xbf16, #tpu.memory_space<vmem>>) attributes {dimension_semantics = [#tpu.dimension_semantics<parallel>], iteration_bounds = array<i64: 1>, scalar_prefetch = 0 : i64, scratch_operands = 0 : i64, tpu.core_type = #tpu.core_type<tc>, window_params = [{transform_indices = @transform_0, window_bounds = array<i64: 16, 256>}, {pipeline_mode = #tpu.pipeline_mode<synchronous>, transform_indices = @transform_1, window_bounds = array<i64: 256, 768>}, {pipeline_mode = #tpu.pipeline_mode<synchronous>, transform_indices = @transform_2, window_bounds = array<i64: 1, 768>}, {transform_indices = @transform_3, window_bounds = array<i64: 16, 768>}]} {
    %c0 = arith.constant 0 : index
    %c0_0 = arith.constant 0 : index
    %0 = vector.load %arg1[%c0, %c0_0] : memref<16x256xf32, #tpu.memory_space<vmem>>, vector<16x256xf32>
    %1 = arith.truncf %0 : vector<16x256xf32> to vector<16x256xbf16>
    %c0_1 = arith.constant 0 : index
    %c0_2 = arith.constant 0 : index
    %2 = vector.load %arg2[%c0_1, %c0_2] : memref<256x768xbf16, #tpu.memory_space<vmem>>, vector<256x768xbf16>
    %cst = arith.constant dense<0.000000e+00> : vector<16x768xf32>
    %3 = tpu.matmul %1, %2, %cst {dimension_numbers = #tpu.dot_dimension_numbers<[1], [0], [0], [1], [0, 0, 1, 1], [], []>} : vector<16x256xbf16>, vector<256x768xbf16>, vector<16x768xf32> -> vector<16x768xf32>
    %c0_3 = arith.constant 0 : index
    %c0_4 = arith.constant 0 : index
    %4 = vector.load %arg3[%c0_3, %c0_4] : memref<1x768xf32, #tpu.memory_space<vmem>>, vector<1x768xf32>
    %5 = vector.broadcast %4 : vector<1x768xf32> to vector<16x768xf32>
    %6 = arith.addf %3, %5 : vector<16x768xf32>
    %7 = arith.truncf %6 : vector<16x768xf32> to vector<16x768xbf16>
    %c0_5 = arith.constant 0 : index
    %c0_6 = arith.constant 0 : index
    %8 = vector.load %arg4[%c0_5, %c0_6] : memref<16x768xbf16, #tpu.memory_space<vmem>>, vector<16x768xbf16>
    tpu.vector_store %arg4[%c0_5, %c0_6], %7 {strides = array<i32>} : memref<16x768xbf16, #tpu.memory_space<vmem>>, vector<16x768xbf16>,
    return
  }
  func.func @transform_0(%arg0: i32) -> (i32, i32) {
    %c0_i32 = arith.constant 0 : i32
    %c0_i32_0 = arith.constant 0 : i32
    return %arg0, %c0_i32 : i32, i32
  }
  func.func @transform_1(%arg0: i32) -> (i32, i32) {
    %c0_i32 = arith.constant 0 : i32
    %c0_i32_0 = arith.constant 0 : i32
    %c0_i32_1 = arith.constant 0 : i32
    return %c0_i32, %c0_i32_0 : i32, i32
  }
  func.func @transform_2(%arg0: i32) -> (i32, i32) {
    %c0_i32 = arith.constant 0 : i32
    %c0_i32_0 = arith.constant 0 : i32
    %c0_i32_1 = arith.constant 0 : i32
    return %c0_i32, %c0_i32_0 : i32, i32
  }
  func.func @transform_3(%arg0: i32) -> (i32, i32) {
    %c0_i32 = arith.constant 0 : i32
    %c0_i32_0 = arith.constant 0 : i32
    return %arg0, %c0_i32 : i32, i32
  }
}

</mosaic_0001>

<llo_original>
// kernel: tpu_custom_call.1
$region0: #{tpu_custom_call.1}
  #allocation0 [shape = 'u32[]', space=smem, size = 0x4, offset = 0x4, fixed_abs, tag = 'smem constant byte address 0x4 - core index']
  #allocation1 [shape = 'u32[144,128]{1,0:T(1,128)}', space=vmem, size = 0x12000, scoped, tag = 'internal scratch']
  %s0 = inlined_call_operand.hbm [shape: f32[16,256], index: 0, kind: input, shape index: {}]
  %s1 = inlined_call_operand.hbm [shape: bf16[256,768], index: 1, kind: input, shape index: {}]
  %s2 = inlined_call_operand.hbm [shape: f32[1,768], index: 2, kind: input, shape index: {}]
  %s3 = inlined_call_operand.hbm [shape: bf16[16,768], index: 3, kind: output, shape index: {}]
  %s4 = sld [smem:[#allocation0]]
  $region34: #{tpu_custom_call.1} parent=0
    _
  %s6 = ssub.s32 1, %s4
  %s7 = scalar_select 0, %s6, %s4
  $region1: #{tpu_custom_call.1} parent=0
    #allocation2 [shape = 'u8[16384]{0}', space=vmem, size = 0x4000, scoped, tag = 'input window, operand 0, single buffered']
    #allocation3 [shape = 's32[1]{0}', space=sflag, size = 0x4, scoped, tag = 'scoped memory for tpu_custom_call.1']
    #allocation4 [shape = 's32[1]{0}', space=sflag, size = 0x4, scoped, tag = 'scoped memory for tpu_custom_call.1']
    #allocation5 [shape = 'u8[393216]{0}', space=vmem, size = 0x60000, scoped, tag = 'input window, operand 1, single buffered']
    #allocation6 [shape = 's32[1]{0}', space=sflag, size = 0x4, scoped, tag = 'scoped memory for tpu_custom_call.1']
    #allocation7 [shape = 'u8[3072]{0}', space=vmem, size = 0xc00, scoped, tag = 'input window, operand 2, single buffered']
    #allocation8 [shape = 'u8[24576]{0}', space=vmem, size = 0x6000, scoped, tag = 'output window, operand 0, single buffered']
    %8 = vsyncpa [#allocation3], 0
    %9 = vsyncpa [#allocation6], 0
    %10 = vsyncpa [#allocation4], 0
    // Predicated region
    $region2: #{tpu_custom_call.1} parent=1 // pred_check
      _
    $region3: #{tpu_custom_call.1} parent=1 // pred_check_branch
      %12 = sbr.rel (0) target = $region5
    $region4: #{tpu_custom_call.1} parent=1 // pred_region
      %s14 = ssub.s32 512, 512
      %15 = vsyncadd [#allocation3], %s14
      %s16 = sshll.u32 [#allocation2], 4
      %s17 = int_to_ptr.vmem [resolvable:$true] %s16
      %22 = dma.hbm_to_vmem [thread:$0]  %s0, 512, %s17, [#allocation3], 256, 256, 16
    $region5: #{tpu_custom_call.1} parent=1 // pred_fallthru
      _
    // Predicated region
    $region6: #{tpu_custom_call.1} parent=1 // pred_check
      _
    $region7: #{tpu_custom_call.1} parent=1 // pred_check_branch
      %24 = sbr.rel (0) target = $region9
    $region8: #{tpu_custom_call.1} parent=1 // pred_region
      %s26 = ssub.s32 12288, 12288
      %27 = vsyncadd [#allocation6], %s26
      %s28 = sshll.u32 [#allocation5], 4
      %s29 = int_to_ptr.vmem [resolvable:$true] %s28
      %34 = dma.hbm_to_vmem [thread:$0]  %s1, 12288, %s29, [#allocation6], 384, 384, 24
    $region9: #{tpu_custom_call.1} parent=1 // pred_fallthru
      _
    // Predicated region
    $region10: #{tpu_custom_call.1} parent=1 // pred_check
      _
    $region11: #{tpu_custom_call.1} parent=1 // pred_check_branch
      %36 = sbr.rel (0) target = $region13
    $region12: #{tpu_custom_call.1} parent=1 // pred_region
      %s38 = ssub.s32 96, 96
      %39 = vsyncadd [#allocation6], %s38
      %s41 = sshll.u32 [#allocation7], 4
      %s42 = int_to_ptr.vmem [resolvable:$true] %s41
      %44 = dma.hbm_to_vmem [thread:$0]  %s2, 96, %s42, [#allocation6]
    $region13: #{tpu_custom_call.1} parent=1 // pred_fallthru
      _
    // Predicated region
    $region14: #{tpu_custom_call.1} parent=1 // pred_check
      _
    $region15: #{tpu_custom_call.1} parent=1 // pred_check_branch
      %46 = sbr.rel (0) target = $region17
    $region16: #{tpu_custom_call.1} parent=1 // pred_region
      %47 = dma.done [#allocation3], 512
    $region17: #{tpu_custom_call.1} parent=1 // pred_fallthru
      _
    // Predicated region
    $region18: #{tpu_custom_call.1} parent=1 // pred_check
      _
    $region19: #{tpu_custom_call.1} parent=1 // pred_check_branch
      %49 = sbr.rel (0) target = $region21
    $region20: #{tpu_custom_call.1} parent=1 // pred_region
      %50 = dma.done [#allocation6], 12288
    $region21: #{tpu_custom_call.1} parent=1 // pred_fallthru
      _
    // Predicated region
    $region22: #{tpu_custom_call.1} parent=1 // pred_check
      _
    $region23: #{tpu_custom_call.1} parent=1 // pred_check_branch
      %52 = sbr.rel (0) target = $region25
    $region24: #{tpu_custom_call.1} parent=1 // pred_region
      %53 = dma.done [#allocation6], 96
    $region25: #{tpu_custom_call.1} parent=1 // pred_fallthru
      _
    %v54 = vld [vmem:[#allocation2] sm:$0xff]
    %v55 = vld [vmem:[#allocation2 + $0x8] sm:$0xff]
    %v56 = vld [vmem:[#allocation2 + $0x10] sm:$0xff]
    %v57 = vld [vmem:[#allocation2 + $0x18] sm:$0xff]
    %v58 = vpack.c.bf16 %v56, %v54
    %v59 = vpack.c.bf16 %v57, %v55
    %v60 = vld [vmem:[#allocation5] sm:$0xff]
    %v61 = vld [vmem:[#allocation5 + $0x8] sm:$0xff]
    %v62 = vld [vmem:[#allocation5 + $0x10] sm:$0xff]
    %v63 = vld [vmem:[#allocation5 + $0x18] sm:$0xff]
    %v64 = vld [vmem:[#allocation5 + $0x20] sm:$0xff]
    %v65 = vld [vmem:[#allocation5 + $0x28] sm:$0xff]
    %v66 = vld [vmem:[#allocation5 + $0x30] sm:$0xff]
    %v67 = vld [vmem:[#allocation5 + $0x38] sm:$0xff]
    %v68 = vld [vmem:[#allocation5 + $0x40] sm:$0xff]
    %v69 = vld [vmem:[#allocation5 + $0x48] sm:$0xff]
    %v70 = vld [vmem:[#allocation5 + $0x50] sm:$0xff]
    %v71 = vld [vmem:[#allocation5 + $0x58] sm:$0xff]
    %v72 = vld [vmem:[#allocation5 + $0x60] sm:$0xff]
    %v73 = vld [vmem:[#allocation5 + $0x68] sm:$0xff]
    %v74 = vld [vmem:[#allocation5 + $0x70] sm:$0xff]
    %v75 = vld [vmem:[#allocation5 + $0x78] sm:$0xff]
    %v76 = vld [vmem:[#allocation5 + $0x80] sm:$0xff]
    %v77 = vld [vmem:[#allocation5 + $0x88] sm:$0xff]
    %v78 = vld [vmem:[#allocation5 + $0x90] sm:$0xff]
    %v79 = vld [vmem:[#allocation5 + $0x98] sm:$0xff]
    %v80 = vld [vmem:[#allocation5 + $0xa0] sm:$0xff]
    %v81 = vld [vmem:[#allocation5 + $0xa8] sm:$0xff]
    %v82 = vld [vmem:[#allocation5 + $0xb0] sm:$0xff]
    %v83 = vld [vmem:[#allocation5 + $0xb8] sm:$0xff]
    %v84 = vld [vmem:[#allocation5 + $0xc0] sm:$0xff]
    %v85 = vld [vmem:[#allocation5 + $0xc8] sm:$0xff]
    %v86 = vld [vmem:[#allocation5 + $0xd0] sm:$0xff]
    %v87 = vld [vmem:[#allocation5 + $0xd8] sm:$0xff]
    %v88 = vld [vmem:[#allocation5 + $0xe0] sm:$0xff]
    %v89 = vld [vmem:[#allocation5 + $0xe8] sm:$0xff]
    %v90 = vld [vmem:[#allocation5 + $0xf0] sm:$0xff]
    %v91 = vld [vmem:[#allocation5 + $0xf8] sm:$0xff]
    %v92 = vld [vmem:[#allocation5 + $0x100] sm:$0xff]
    %v93 = vld [vmem:[#allocation5 + $0x108] sm:$0xff]
    %v94 = vld [vmem:[#allocation5 + $0x110] sm:$0xff]
    %v95 = vld [vmem:[#allocation5 + $0x118] sm:$0xff]
    %v96 = vld [vmem:[#allocation5 + $0x120] sm:$0xff]
    %v97 = vld [vmem:[#allocation5 + $0x128] sm:$0xff]
    %v98 = vld [vmem:[#allocation5 + $0x130] sm:$0xff]
    %v99 = vld [vmem:[#allocation5 + $0x138] sm:$0xff]
    %v100 = vld [vmem:[#allocation5 + $0x140] sm:$0xff]
    %v101 = vld [vmem:[#allocation5 + $0x148] sm:$0xff]
    %v102 = vld [vmem:[#allocation5 + $0x150] sm:$0xff]
    %v103 = vld [vmem:[#allocation5 + $0x158] sm:$0xff]
    %v104 = vld [vmem:[#allocation5 + $0x160] sm:$0xff]
    %v105 = vld [vmem:[#allocation5 + $0x168] sm:$0xff]
    %v106 = vld [vmem:[#allocation5 + $0x170] sm:$0xff]
    %v107 = vld [vmem:[#allocation5 + $0x178] sm:$0xff]
    %v108 = vld [vmem:[#allocation5 + $0x180] sm:$0xff]
    %v109 = vld [vmem:[#allocation5 + $0x188] sm:$0xff]
    %v110 = vld [vmem:[#allocation5 + $0x190] sm:$0xff]
    %v111 = vld [vmem:[#allocation5 + $0x198] sm:$0xff]
    %v112 = vld [vmem:[#allocation5 + $0x1a0] sm:$0xff]
    %v113 = vld [vmem:[#allocation5 + $0x1a8] sm:$0xff]
    %v114 = vld [vmem:[#allocation5 + $0x1b0] sm:$0xff]
    %v115 = vld [vmem:[#allocation5 + $0x1b8] sm:$0xff]
    %v116 = vld [vmem:[#allocation5 + $0x1c0] sm:$0xff]
    %v117 = vld [vmem:[#allocation5 + $0x1c8] sm:$0xff]
    %v118 = vld [vmem:[#allocation5 + $0x1d0] sm:$0xff]
    %v119 = vld [vmem:[#allocation5 + $0x1d8] sm:$0xff]
    %v120 = vld [vmem:[#allocation5 + $0x1e0] sm:$0xff]
    %v121 = vld [vmem:[#allocation5 + $0x1e8] sm:$0xff]
    %v122 = vld [vmem:[#allocation5 + $0x1f0] sm:$0xff]
    %v123 = vld [vmem:[#allocation5 + $0x1f8] sm:$0xff]
    %v124 = vld [vmem:[#allocation5 + $0x200] sm:$0xff]
    %v125 = vld [vmem:[#allocation5 + $0x208] sm:$0xff]
    %v126 = vld [vmem:[#allocation5 + $0x210] sm:$0xff]
    %v127 = vld [vmem:[#allocation5 + $0x218] sm:$0xff]
    %v128 = vld [vmem:[#allocation5 + $0x220] sm:$0xff]
    %v129 = vld [vmem:[#allocation5 + $0x228] sm:$0xff]
    %v130 = vld [vmem:[#allocation5 + $0x230] sm:$0xff]
    %v131 = vld [vmem:[#allocation5 + $0x238] sm:$0xff]
    %v132 = vld [vmem:[#allocation5 + $0x240] sm:$0xff]
    %v133 = vld [vmem:[#allocation5 + $0x248] sm:$0xff]
    %v134 = vld [vmem:[#allocation5 + $0x250] sm:$0xff]
    %v135 = vld [vmem:[#allocation5 + $0x258] sm:$0xff]
    %v136 = vld [vmem:[#allocation5 + $0x260] sm:$0xff]
    %v137 = vld [vmem:[#allocation5 + $0x268] sm:$0xff]
    %v138 = vld [vmem:[#allocation5 + $0x270] sm:$0xff]
    %v139 = vld [vmem:[#allocation5 + $0x278] sm:$0xff]
    %v140 = vld [vmem:[#allocation5 + $0x280] sm:$0xff]
    %v141 = vld [vmem:[#allocation5 + $0x288] sm:$0xff]
    %v142 = vld [vmem:[#allocation5 + $0x290] sm:$0xff]
    %v143 = vld [vmem:[#allocation5 + $0x298] sm:$0xff]
    %v144 = vld [vmem:[#allocation5 + $0x2a0] sm:$0xff]
    %v145 = vld [vmem:[#allocation5 + $0x2a8] sm:$0xff]
    %v146 = vld [vmem:[#allocation5 + $0x2b0] sm:$0xff]
    %v147 = vld [vmem:[#allocation5 + $0x2b8] sm:$0xff]
    %v148 = vld [vmem:[#allocation5 + $0x2c0] sm:$0xff]
    %v149 = vld [vmem:[#allocation5 + $0x2c8] sm:$0xff]
    %v150 = vld [vmem:[#allocation5 + $0x2d0] sm:$0xff]
    %v151 = vld [vmem:[#allocation5 + $0x2d8] sm:$0xff]
    %v152 = vld [vmem:[#allocation5 + $0x2e0] sm:$0xff]
    %v153 = vld [vmem:[#allocation5 + $0x2e8] sm:$0xff]
    %v154 = vld [vmem:[#allocation5 + $0x2f0] sm:$0xff]
    %v155 = vld [vmem:[#allocation5 + $0x2f8] sm:$0xff]
    %v156 = vld [vmem:[#allocation7] sm:$0x3f]
    %v158 = vlaneseq
    %v159 = vshrl.u32 %v158, 7
    %v160 = vsub.s32 0, %v159
    %v161 = vrot.slane %v156, %v160
    %v162 = vlaneseq
    %v163 = vshrl.u32 %v162, 7
    %v164 = vsub.s32 1, %v163
    %v165 = vrot.slane %v156, %v164
    %v166 = vlaneseq
    %v167 = vshrl.u32 %v166, 7
    %v168 = vsub.s32 2, %v167
    %v169 = vrot.slane %v156, %v168
    %v170 = vlaneseq
    %v171 = vshrl.u32 %v170, 7
    %v172 = vsub.s32 3, %v171
    %v173 = vrot.slane %v156, %v172
    %v174 = vlaneseq
    %v175 = vshrl.u32 %v174, 7
    %v176 = vsub.s32 4, %v175
    %v177 = vrot.slane %v156, %v176
    %v178 = vlaneseq
    %v179 = vshrl.u32 %v178, 7
    %v180 = vsub.s32 5, %v179
    %v181 = vrot.slane %v156, %v180
    %v284 = vunpack.c.l.b16 %v60
    %v285 = vunpack.c.h.b16 %v60
    %v286 = vunpack.c.l.b16 %v61
    %v287 = vunpack.c.h.b16 %v61
    %v288 = vunpack.c.l.b16 %v62
    %v289 = vunpack.c.h.b16 %v62
    %v290 = vunpack.c.l.b16 %v63
    %v291 = vunpack.c.h.b16 %v63
    %v292 = vunpack.c.l.b16 %v64
    %v293 = vunpack.c.h.b16 %v64
    %v294 = vunpack.c.l.b16 %v65
    %v295 = vunpack.c.h.b16 %v65
    %v296 = vunpack.c.l.b16 %v66
    %v297 = vunpack.c.h.b16 %v66
    %v298 = vunpack.c.l.b16 %v67
    %v299 = vunpack.c.h.b16 %v67
    %v300 = vunpack.c.l.b16 %v68
    %v301 = vunpack.c.h.b16 %v68
    %v302 = vunpack.c.l.b16 %v69
    %v303 = vunpack.c.h.b16 %v69
    %v304 = vunpack.c.l.b16 %v70
    %v305 = vunpack.c.h.b16 %v70
    %v306 = vunpack.c.l.b16 %v71
    %v307 = vunpack.c.h.b16 %v71
    %v308 = vunpack.c.l.b16 %v72
    %v309 = vunpack.c.h.b16 %v72
    %v310 = vunpack.c.l.b16 %v73
    %v311 = vunpack.c.h.b16 %v73
    %v312 = vunpack.c.l.b16 %v74
    %v313 = vunpack.c.h.b16 %v74
    %v314 = vunpack.c.l.b16 %v75
    %v315 = vunpack.c.h.b16 %v75
    %v316 = vunpack.c.l.b16 %v76
    %v317 = vunpack.c.h.b16 %v76
    %v318 = vunpack.c.l.b16 %v77
    %v319 = vunpack.c.h.b16 %v77
    %v320 = vunpack.c.l.b16 %v78
    %v321 = vunpack.c.h.b16 %v78
    %v322 = vunpack.c.l.b16 %v79
    %v323 = vunpack.c.h.b16 %v79
    %v324 = vunpack.c.l.b16 %v80
    %v325 = vunpack.c.h.b16 %v80
    %v326 = vunpack.c.l.b16 %v81
    %v327 = vunpack.c.h.b16 %v81
    %v328 = vunpack.c.l.b16 %v82
    %v329 = vunpack.c.h.b16 %v82
    %v330 = vunpack.c.l.b16 %v83
    %v331 = vunpack.c.h.b16 %v83
    %v332 = vunpack.c.l.b16 %v84
    %v333 = vunpack.c.h.b16 %v84
    %v334 = vunpack.c.l.b16 %v85
    %v335 = vunpack.c.h.b16 %v85
    %v336 = vunpack.c.l.b16 %v86
    %v337 = vunpack.c.h.b16 %v86
    %v338 = vunpack.c.l.b16 %v87
    %v339 = vunpack.c.h.b16 %v87
    %v340 = vunpack.c.l.b16 %v88
    %v341 = vunpack.c.h.b16 %v88
    %v342 = vunpack.c.l.b16 %v89
    %v343 = vunpack.c.h.b16 %v89
    %v344 = vunpack.c.l.b16 %v90
    %v345 = vunpack.c.h.b16 %v90
    %v346 = vunpack.c.l.b16 %v91
    %v347 = vunpack.c.h.b16 %v91
    %v348 = vunpack.c.l.b16 %v92
    %v349 = vunpack.c.h.b16 %v92
    %v350 = vunpack.c.l.b16 %v93
    %v351 = vunpack.c.h.b16 %v93
    %v352 = vunpack.c.l.b16 %v94
    %v353 = vunpack.c.h.b16 %v94
    %v354 = vunpack.c.l.b16 %v95
    %v355 = vunpack.c.h.b16 %v95
    %v356 = vunpack.c.l.b16 %v96
    %v357 = vunpack.c.h.b16 %v96
    %v358 = vunpack.c.l.b16 %v97
    %v359 = vunpack.c.h.b16 %v97
    %v360 = vunpack.c.l.b16 %v98
    %v361 = vunpack.c.h.b16 %v98
    %v362 = vunpack.c.l.b16 %v99
    %v363 = vunpack.c.h.b16 %v99
    %v364 = vunpack.c.l.b16 %v100
    %v365 = vunpack.c.h.b16 %v100
    %v366 = vunpack.c.l.b16 %v101
    %v367 = vunpack.c.h.b16 %v101
    %v368 = vunpack.c.l.b16 %v102
    %v369 = vunpack.c.h.b16 %v102
    %v370 = vunpack.c.l.b16 %v103
    %v371 = vunpack.c.h.b16 %v103
    %v372 = vunpack.c.l.b16 %v104
    %v373 = vunpack.c.h.b16 %v104
    %v374 = vunpack.c.l.b16 %v105
    %v375 = vunpack.c.h.b16 %v105
    %v376 = vunpack.c.l.b16 %v106
    %v377 = vunpack.c.h.b16 %v106
    %v378 = vunpack.c.l.b16 %v107
    %v379 = vunpack.c.h.b16 %v107
    %v380 = vunpack.c.l.b16 %v108
    %v381 = vunpack.c.h.b16 %v108
    %v382 = vunpack.c.l.b16 %v109
    %v383 = vunpack.c.h.b16 %v109
    %v384 = vunpack.c.l.b16 %v110
    %v385 = vunpack.c.h.b16 %v110
    %v386 = vunpack.c.l.b16 %v111
    %v387 = vunpack.c.h.b16 %v111
    %v388 = vunpack.c.l.b16 %v112
    %v389 = vunpack.c.h.b16 %v112
    %v390 = vunpack.c.l.b16 %v113
    %v391 = vunpack.c.h.b16 %v113
    %v392 = vunpack.c.l.b16 %v114
    %v393 = vunpack.c.h.b16 %v114
    %v394 = vunpack.c.l.b16 %v115
    %v395 = vunpack.c.h.b16 %v115
    %v396 = vunpack.c.l.b16 %v116
    %v397 = vunpack.c.h.b16 %v116
    %v398 = vunpack.c.l.b16 %v117
    %v399 = vunpack.c.h.b16 %v117
    %v400 = vunpack.c.l.b16 %v118
    %v401 = vunpack.c.h.b16 %v118
    %v402 = vunpack.c.l.b16 %v119
    %v403 = vunpack.c.h.b16 %v119
    %v404 = vunpack.c.l.b16 %v120
    %v405 = vunpack.c.h.b16 %v120
    %v406 = vunpack.c.l.b16 %v121
    %v407 = vunpack.c.h.b16 %v121
    %v408 = vunpack.c.l.b16 %v122
    %v409 = vunpack.c.h.b16 %v122
    %v410 = vunpack.c.l.b16 %v123
    %v411 = vunpack.c.h.b16 %v123
    %v412 = vunpack.c.l.b16 %v124
    %v413 = vunpack.c.h.b16 %v124
    %v414 = vunpack.c.l.b16 %v125
    %v415 = vunpack.c.h.b16 %v125
    %v416 = vunpack.c.l.b16 %v126
    %v417 = vunpack.c.h.b16 %v126
    %v418 = vunpack.c.l.b16 %v127
    %v419 = vunpack.c.h.b16 %v127
    %v420 = vunpack.c.l.b16 %v128
    %v421 = vunpack.c.h.b16 %v128
    %v422 = vunpack.c.l.b16 %v129
    %v423 = vunpack.c.h.b16 %v129
    %v424 = vunpack.c.l.b16 %v130
    %v425 = vunpack.c.h.b16 %v130
    %v426 = vunpack.c.l.b16 %v131
    %v427 = vunpack.c.h.b16 %v131
    %v428 = vunpack.c.l.b16 %v132
    %v429 = vunpack.c.h.b16 %v132
    %v430 = vunpack.c.l.b16 %v133
    %v431 = vunpack.c.h.b16 %v133
    %v432 = vunpack.c.l.b16 %v134
    %v433 = vunpack.c.h.b16 %v134
    %v434 = vunpack.c.l.b16 %v135
    %v435 = vunpack.c.h.b16 %v135
    %v436 = vunpack.c.l.b16 %v136
    %v437 = vunpack.c.h.b16 %v136
    %v438 = vunpack.c.l.b16 %v137
    %v439 = vunpack.c.h.b16 %v137
    %v440 = vunpack.c.l.b16 %v138
    %v441 = vunpack.c.h.b16 %v138
    %v442 = vunpack.c.l.b16 %v139
    %v443 = vunpack.c.h.b16 %v139
    %v444 = vunpack.c.l.b16 %v140
    %v445 = vunpack.c.h.b16 %v140
    %v446 = vunpack.c.l.b16 %v141
    %v447 = vunpack.c.h.b16 %v141
    %v448 = vunpack.c.l.b16 %v142
    %v449 = vunpack.c.h.b16 %v142
    %v450 = vunpack.c.l.b16 %v143
    %v451 = vunpack.c.h.b16 %v143
    %v452 = vunpack.c.l.b16 %v144
    %v453 = vunpack.c.h.b16 %v144
    %v454 = vunpack.c.l.b16 %v145
    %v455 = vunpack.c.h.b16 %v145
    %v456 = vunpack.c.l.b16 %v146
    %v457 = vunpack.c.h.b16 %v146
    %v458 = vunpack.c.l.b16 %v147
    %v459 = vunpack.c.h.b16 %v147
    %v460 = vunpack.c.l.b16 %v148
    %v461 = vunpack.c.h.b16 %v148
    %v462 = vunpack.c.l.b16 %v149
    %v463 = vunpack.c.h.b16 %v149
    %v464 = vunpack.c.l.b16 %v150
    %v465 = vunpack.c.h.b16 %v150
    %v466 = vunpack.c.l.b16 %v151
    %v467 = vunpack.c.h.b16 %v151
    %v468 = vunpack.c.l.b16 %v152
    %v469 = vunpack.c.h.b16 %v152
    %v470 = vunpack.c.l.b16 %v153
    %v471 = vunpack.c.h.b16 %v153
    %v472 = vunpack.c.l.b16 %v154
    %v473 = vunpack.c.h.b16 %v154
    %v474 = vunpack.c.l.b16 %v155
    %v475 = vunpack.c.h.b16 %v155
    %v476 = vpack.c.b16 %v290, %v284
    %v477 = vpack.c.b16 %v291, %v285
    %v478 = vpack.c.b16 %v292, %v286
    %v479 = vpack.c.b16 %v293, %v287
    %v480 = vpack.c.b16 %v294, %v288
    %v481 = vpack.c.b16 %v295, %v289
    %v482 = vpack.c.b16 %v302, %v296
    %v483 = vpack.c.b16 %v303, %v297
    %v484 = vpack.c.b16 %v304, %v298
    %v485 = vpack.c.b16 %v305, %v299
    %v486 = vpack.c.b16 %v306, %v300
    %v487 = vpack.c.b16 %v307, %v301
    %v488 = vpack.c.b16 %v314, %v308
    %v489 = vpack.c.b16 %v315, %v309
    %v490 = vpack.c.b16 %v316, %v310
    %v491 = vpack.c.b16 %v317, %v311
    %v492 = vpack.c.b16 %v318, %v312
    %v493 = vpack.c.b16 %v319, %v313
    %v494 = vpack.c.b16 %v326, %v320
    %v495 = vpack.c.b16 %v327, %v321
    %v496 = vpack.c.b16 %v328, %v322
    %v497 = vpack.c.b16 %v329, %v323
    %v498 = vpack.c.b16 %v330, %v324
    %v499 = vpack.c.b16 %v331, %v325
    %v500 = vpack.c.b16 %v338, %v332
    %v501 = vpack.c.b16 %v339, %v333
    %v502 = vpack.c.b16 %v340, %v334
    %v503 = vpack.c.b16 %v341, %v335
    %v504 = vpack.c.b16 %v342, %v336
    %v505 = vpack.c.b16 %v343, %v337
    %v506 = vpack.c.b16 %v350, %v344
    %v507 = vpack.c.b16 %v351, %v345
    %v508 = vpack.c.b16 %v352, %v346
    %v509 = vpack.c.b16 %v353, %v347
    %v510 = vpack.c.b16 %v354, %v348
    %v511 = vpack.c.b16 %v355, %v349
    %v512 = vpack.c.b16 %v362, %v356
    %v513 = vpack.c.b16 %v363, %v357
    %v514 = vpack.c.b16 %v364, %v358
    %v515 = vpack.c.b16 %v365, %v359
    %v516 = vpack.c.b16 %v366, %v360
    %v517 = vpack.c.b16 %v367, %v361
    %v518 = vpack.c.b16 %v374, %v368
    %v519 = vpack.c.b16 %v375, %v369
    %v520 = vpack.c.b16 %v376, %v370
    %v521 = vpack.c.b16 %v377, %v371
    %v522 = vpack.c.b16 %v378, %v372
    %v523 = vpack.c.b16 %v379, %v373
    %v524 = vpack.c.b16 %v386, %v380
    %v525 = vpack.c.b16 %v387, %v381
    %v526 = vpack.c.b16 %v388, %v382
    %v527 = vpack.c.b16 %v389, %v383
    %v528 = vpack.c.b16 %v390, %v384
    %v529 = vpack.c.b16 %v391, %v385
    %v530 = vpack.c.b16 %v398, %v392
    %v531 = vpack.c.b16 %v399, %v393
    %v532 = vpack.c.b16 %v400, %v394
    %v533 = vpack.c.b16 %v401, %v395
    %v534 = vpack.c.b16 %v402, %v396
    %v535 = vpack.c.b16 %v403, %v397
    %v536 = vpack.c.b16 %v410, %v404
    %v537 = vpack.c.b16 %v411, %v405
    %v538 = vpack.c.b16 %v412, %v406
    %v539 = vpack.c.b16 %v413, %v407
    %v540 = vpack.c.b16 %v414, %v408
    %v541 = vpack.c.b16 %v415, %v409
    %v542 = vpack.c.b16 %v422, %v416
    %v543 = vpack.c.b16 %v423, %v417
    %v544 = vpack.c.b16 %v424, %v418
    %v545 = vpack.c.b16 %v425, %v419
    %v546 = vpack.c.b16 %v426, %v420
    %v547 = vpack.c.b16 %v427, %v421
    %v548 = vpack.c.b16 %v434, %v428
    %v549 = vpack.c.b16 %v435, %v429
    %v550 = vpack.c.b16 %v436, %v430
    %v551 = vpack.c.b16 %v437, %v431
    %v552 = vpack.c.b16 %v438, %v432
    %v553 = vpack.c.b16 %v439, %v433
    %v554 = vpack.c.b16 %v446, %v440
    %v555 = vpack.c.b16 %v447, %v441
    %v556 = vpack.c.b16 %v448, %v442
    %v557 = vpack.c.b16 %v449, %v443
    %v558 = vpack.c.b16 %v450, %v444
    %v559 = vpack.c.b16 %v451, %v445
    %v560 = vpack.c.b16 %v458, %v452
    %v561 = vpack.c.b16 %v459, %v453
    %v562 = vpack.c.b16 %v460, %v454
    %v563 = vpack.c.b16 %v461, %v455
    %v564 = vpack.c.b16 %v462, %v456
    %v565 = vpack.c.b16 %v463, %v457
    %v566 = vpack.c.b16 %v470, %v464
    %v567 = vpack.c.b16 %v471, %v465
    %v568 = vpack.c.b16 %v472, %v466
    %v569 = vpack.c.b16 %v473, %v467
    %v570 = vpack.c.b16 %v474, %v468
    %v571 = vpack.c.b16 %v475, %v469
    %668 = vmatprep.subr.bf16.mxu0 %v519
    %669 = vmatpush1.bf16.msra.mxu0 %v518
    %670 = vmatprep.subr.bf16.mxu0 %v513
    %671 = vmatpush1.bf16.msra.mxu0 %v512
    %672 = vmatprep.subr.bf16.mxu0 %v507
    %673 = vmatpush1.bf16.msra.mxu0 %v506
    %674 = vmatprep.subr.bf16.mxu0 %v501
    %675 = vmatpush1.bf16.msra.mxu0 %v500
    %676 = vmatprep.subr.bf16.mxu0 %v495
    %677 = vmatpush1.bf16.msra.mxu0 %v494
    %678 = vmatprep.subr.bf16.mxu0 %v489
    %679 = vmatpush1.bf16.msra.mxu0 %v488
    %680 = vmatprep.subr.bf16.mxu0 %v483
    %681 = vmatpush1.bf16.msra.mxu0 %v482
    %682 = vmatprep.subr.bf16.mxu0 %v477
    %683 = vmatpush1.bf16.msra.mxu0 %v476
    %684 = vmatprep.subr.bf16.mxu0 %v567
    %685 = vmatpush2.bf16.msra.mxu0 %v566
    %686 = vmatprep.subr.bf16.mxu0 %v561
    %687 = vmatpush2.bf16.msra.mxu0 %v560
    %688 = vmatprep.subr.bf16.mxu0 %v555
    %689 = vmatpush2.bf16.msra.mxu0 %v554
    %690 = vmatprep.subr.bf16.mxu0 %v549
    %691 = vmatpush2.bf16.msra.mxu0 %v548
    %692 = vmatprep.subr.bf16.mxu0 %v543
    %693 = vmatpush2.bf16.msra.mxu0 %v542
    %694 = vmatprep.subr.bf16.mxu0 %v537
    %695 = vmatpush2.bf16.msra.mxu0 %v536
    %696 = vmatprep.subr.bf16.mxu0 %v531
    %697 = vmatpush2.bf16.msra.mxu0 %v530
    %698 = vmatprep.subr.bf16.mxu0 %v525
    %699 = vmatpush2.bf16.msra.mxu0 %v524
    %700 = vmatprep.mubr.bf16.mxu0 %v59
    %701 = vmatmul.mubr.bf16.gmra.mxu0 %v58
    %v702 = vpop.f32.mrf.mxu0
    %v703 = vadd.f32 %v161, %v702
    %v704 = vpop.f32.mrf.mxu0
    %v705 = vadd.f32 %v165, %v704
    %v706 = vpop.f32.mrf.mxu0
    %v707 = vadd.f32 %v161, %v706
    %v708 = vpop.f32.mrf.mxu0
    %v709 = vadd.f32 %v165, %v708
    %710 = vdwg.mxu0
    %711 = vmatprep.subr.bf16.mxu0 %v521
    %712 = vmatpush1.bf16.msra.mxu0 %v520
    %713 = vmatprep.subr.bf16.mxu0 %v515
    %714 = vmatpush1.bf16.msra.mxu0 %v514
    %715 = vmatprep.subr.bf16.mxu0 %v509
    %716 = vmatpush1.bf16.msra.mxu0 %v508
    %717 = vmatprep.subr.bf16.mxu0 %v503
    %718 = vmatpush1.bf16.msra.mxu0 %v502
    %719 = vmatprep.subr.bf16.mxu0 %v497
    %720 = vmatpush1.bf16.msra.mxu0 %v496
    %721 = vmatprep.subr.bf16.mxu0 %v491
    %722 = vmatpush1.bf16.msra.mxu0 %v490
    %723 = vmatprep.subr.bf16.mxu0 %v485
    %724 = vmatpush1.bf16.msra.mxu0 %v484
    %725 = vmatprep.subr.bf16.mxu0 %v479
    %726 = vmatpush1.bf16.msra.mxu0 %v478
    %727 = vmatprep.subr.bf16.mxu0 %v569
    %728 = vmatpush2.bf16.msra.mxu0 %v568
    %729 = vmatprep.subr.bf16.mxu0 %v563
    %730 = vmatpush2.bf16.msra.mxu0 %v562
    %731 = vmatprep.subr.bf16.mxu0 %v557
    %732 = vmatpush2.bf16.msra.mxu0 %v556
    %733 = vmatprep.subr.bf16.mxu0 %v551
    %734 = vmatpush2.bf16.msra.mxu0 %v550
    %735 = vmatprep.subr.bf16.mxu0 %v545
    %736 = vmatpush2.bf16.msra.mxu0 %v544
    %737 = vmatprep.subr.bf16.mxu0 %v539
    %738 = vmatpush2.bf16.msra.mxu0 %v538
    %739 = vmatprep.subr.bf16.mxu0 %v533
    %740 = vmatpush2.bf16.msra.mxu0 %v532
    %741 = vmatprep.subr.bf16.mxu0 %v527
    %742 = vmatpush2.bf16.msra.mxu0 %v526
    %743 = vmatprep.mubr.bf16.mxu0 %v59
    %744 = vmatmul.mubr.bf16.gmra.mxu0 %v58
    %v745 = vpop.f32.mrf.mxu0
    %v746 = vadd.f32 %v169, %v745
    %v747 = vpop.f32.mrf.mxu0
    %v748 = vadd.f32 %v173, %v747
    %v749 = vpop.f32.mrf.mxu0
    %v750 = vadd.f32 %v169, %v749
    %v751 = vpop.f32.mrf.mxu0
    %v752 = vadd.f32 %v173, %v751
    %753 = vdwg.mxu0
    %754 = vmatprep.subr.bf16.mxu0 %v523
    %755 = vmatpush1.bf16.msra.mxu0 %v522
    %756 = vmatprep.subr.bf16.mxu0 %v517
    %757 = vmatpush1.bf16.msra.mxu0 %v516
    %758 = vmatprep.subr.bf16.mxu0 %v511
    %759 = vmatpush1.bf16.msra.mxu0 %v510
    %760 = vmatprep.subr.bf16.mxu0 %v505
    %761 = vmatpush1.bf16.msra.mxu0 %v504
    %762 = vmatprep.subr.bf16.mxu0 %v499
    %763 = vmatpush1.bf16.msra.mxu0 %v498
    %764 = vmatprep.subr.bf16.mxu0 %v493
    %765 = vmatpush1.bf16.msra.mxu0 %v492
    %766 = vmatprep.subr.bf16.mxu0 %v487
    %767 = vmatpush1.bf16.msra.mxu0 %v486
    %768 = vmatprep.subr.bf16.mxu0 %v481
    %769 = vmatpush1.bf16.msra.mxu0 %v480
    %770 = vmatprep.subr.bf16.mxu0 %v571
    %771 = vmatpush2.bf16.msra.mxu0 %v570
    %772 = vmatprep.subr.bf16.mxu0 %v565
    %773 = vmatpush2.bf16.msra.mxu0 %v564
    %774 = vmatprep.subr.bf16.mxu0 %v559
    %775 = vmatpush2.bf16.msra.mxu0 %v558
    %776 = vmatprep.subr.bf16.mxu0 %v553
    %777 = vmatpush2.bf16.msra.mxu0 %v552
    %778 = vmatprep.subr.bf16.mxu0 %v547
    %779 = vmatpush2.bf16.msra.mxu0 %v546
    %780 = vmatprep.subr.bf16.mxu0 %v541
    %781 = vmatpush2.bf16.msra.mxu0 %v540
    %782 = vmatprep.subr.bf16.mxu0 %v535
    %783 = vmatpush2.bf16.msra.mxu0 %v534
    %784 = vmatprep.subr.bf16.mxu0 %v529
    %785 = vmatpush2.bf16.msra.mxu0 %v528
    %786 = vmatprep.mubr.bf16.mxu0 %v59
    %787 = vmatmul.mubr.bf16.gmra.mxu0 %v58
    %v788 = vpop.f32.mrf.mxu0
    %v789 = vadd.f32 %v177, %v788
    %v790 = vpop.f32.mrf.mxu0
    %v791 = vadd.f32 %v181, %v790
    %v792 = vpop.f32.mrf.mxu0
    %v793 = vadd.f32 %v177, %v792
    %v794 = vpop.f32.mrf.mxu0
    %v795 = vadd.f32 %v181, %v794
    %796 = vdwg.mxu0
    %v797 = vpack.c.bf16 %v707, %v703
    %v798 = vpack.c.bf16 %v709, %v705
    %v799 = vpack.c.bf16 %v750, %v746
    %v800 = vpack.c.bf16 %v752, %v748
    %v801 = vpack.c.bf16 %v793, %v789
    %v802 = vpack.c.bf16 %v795, %v791
    %v809 = vunpack.c.l.b16 %v797
    %v810 = vunpack.c.l.b16 %v798
    %v811 = vunpack.c.l.b16 %v799
    %v812 = vunpack.c.l.b16 %v800
    %v813 = vunpack.c.l.b16 %v801
    %v814 = vunpack.c.l.b16 %v802
    %v815 = vunpack.c.h.b16 %v797
    %v816 = vunpack.c.h.b16 %v798
    %v817 = vunpack.c.h.b16 %v799
    %v818 = vunpack.c.h.b16 %v800
    %v819 = vunpack.c.h.b16 %v801
    %v820 = vunpack.c.h.b16 %v802
    %v821 = vpack.c.b16 %v810, %v809
    %v822 = vpack.c.b16 %v812, %v811
    %v823 = vpack.c.b16 %v814, %v813
    %v824 = vpack.c.b16 %v816, %v815
    %v825 = vpack.c.b16 %v818, %v817
    %v826 = vpack.c.b16 %v820, %v819
    %833 = vst [vmem:[#allocation8] sm:$0xff] %v821
    %834 = vst [vmem:[#allocation8 + $0x8] sm:$0xff] %v822
    %835 = vst [vmem:[#allocation8 + $0x10] sm:$0xff] %v823
    %836 = vst [vmem:[#allocation8 + $0x18] sm:$0xff] %v824
    %837 = vst [vmem:[#allocation8 + $0x20] sm:$0xff] %v825
    %838 = vst [vmem:[#allocation8 + $0x28] sm:$0xff] %v826
    // Predicated region
    $region26: #{tpu_custom_call.1} parent=1 // pred_check
      _
    $region27: #{tpu_custom_call.1} parent=1 // pred_check_branch
      %840 = sbr.rel (0) target = $region29
    $region28: #{tpu_custom_call.1} parent=1 // pred_region
      %s842 = ssub.s32 768, 768
      %843 = vsyncadd [#allocation4], %s842
      %s844 = sshll.u32 [#allocation8], 4
      %s845 = int_to_ptr.vmem [resolvable:$true] %s844
      %850 = dma.vmem_to_hbm [thread:$0]  %s845, 768, %s3, [#allocation4], 384, 384, 24
    $region29: #{tpu_custom_call.1} parent=1 // pred_fallthru
      _
    // Predicated region
    $region30: #{tpu_custom_call.1} parent=1 // pred_check
      _
    $region31: #{tpu_custom_call.1} parent=1 // pred_check_branch
      %852 = sbr.rel (0) target = $region33
    $region32: #{tpu_custom_call.1} parent=1 // pred_region
      %853 = dma.done [#allocation4], 768
    $region33: #{tpu_custom_call.1} parent=1 // pred_fallthru
      _
    %854 = vsyncpa [#allocation3], 1
    %855 = vsyncpa [#allocation6], 1
    %856 = vsyncpa [#allocation4], 1

</llo_original>
